<compile_context>
chip_gen: v5e
topology: v5e:2x2
jax: 0.10.0
libtpu: 0.0.40
codegen_flags: <defaults>
</compile_context>

<pallas_src>
import functools

import jax
import jax.numpy as jnp
from jax.experimental import pallas as pl
from jax.experimental.pallas import tpu as pltpu


def _leaky_relu(x, slope=0.1):
    return jnp.where(x >= 0, x, slope * x)


def critic_kernel(*refs, n_inputs):
    """refs = (x_0..x_{n_inputs-1}, W0_0..W0_{n_inputs-1}, b0, W1, b1, ..., WL, bL, out).

    Layer 0 is computed as a sum of per-input matmuls (fused concat).  Hidden layers get
    LeakyReLU(0.1); the output layer is identity.  Accumulation in f32 on the MXU.
    """
    xs = [refs[i][...] for i in range(n_inputs)]
    out_ref = refs[-1]
    wb = refs[n_inputs:-1]

    # ---- layer 0: sum_i x_i @ W0_i + b0  (== concat(x_i) @ W0 + b0) ----
    idx = 0
    h = jnp.dot(xs[0], wb[idx][...], preferred_element_type=jnp.float32)
    idx += 1
    for j in range(1, n_inputs):
        h = h + jnp.dot(xs[j], wb[idx][...], preferred_element_type=jnp.float32)
        idx += 1
    h = h + wb[idx][...]
    idx += 1

    # ---- remaining layers ----
    n_rest = (len(wb) - idx) // 2
    if n_rest > 0:
        h = _leaky_relu(h)                      # layer 0 was a hidden layer
    for i in range(n_rest):
        w = wb[idx + 2 * i][...]
        b = wb[idx + 2 * i + 1][...]
        h = jnp.dot(h, w, preferred_element_type=jnp.float32) + b
        if i < n_rest - 1:                      # hidden activation; output activation = identity
            h = _leaky_relu(h)

    out_ref[...] = h.astype(out_ref.dtype)


def critic_forward(params, state, action=None, *, block_b=512):
    """Fused Critic forward.  Returns value of shape state.shape[:-1] + (1,)."""
    weights = params["weights"]                 # list of (w, b), w: (in, out), b: (1, out)
    inputs = [state] if action is None else [state, action]
    head_shape = state.shape[:-1]
    xs = [a.reshape(-1, a.shape[-1]).astype(jnp.float32) for a in inputs]
    B = xs[0].shape[0]
    n_inputs = len(xs)
    out_dim = weights[-1][0].shape[1]           # == 1 for the Critic

    # Split the first-layer weight row-wise per input (fuses the concat into the kernel).
    w0, b0 = weights[0]
    flat = []
    off = 0
    for a in xs:
        d = a.shape[-1]
        flat.append(w0[off:off + d])            # (d, H) -- tiny slice
        off += d
    flat.append(b0)
    for w, b in weights[1:]:
        flat += [w, b]

    kernel = functools.partial(critic_kernel, n_inputs=n_inputs)

    if B <= block_b:
        # Small-batch path: no grid (no grid-loop overhead), everything resident in VMEM,
        # a single output DMA.
        vmem = pl.BlockSpec(memory_space=pltpu.MemorySpace.VMEM)
        out = pl.pallas_call(
            kernel,
            out_shape=jax.ShapeDtypeStruct((B, out_dim), jnp.float32),
            in_specs=[vmem] * (n_inputs + len(flat)),
            out_specs=vmem,
        )(*xs, *flat)
    else:
        # Large-batch path: tile over batch so the only HBM-heavy operands (state/action) are
        # double-buffered by BlockSpec pipelining while the tiny weights stay resident
        # (constant index_map -> fetched once).  Batch axis "parallel" -> megacore sharding.
        tb = block_b
        n_blocks = pl.cdiv(B, tb)
        b_pad = n_blocks * tb
        if b_pad != B:
            xs = [jnp.pad(a, ((0, b_pad - B), (0, 0))) for a in xs]

        in_specs = [pl.BlockSpec((tb, a.shape[1]), lambda i: (i, 0)) for a in xs]
        for arr in flat:
            in_specs.append(pl.BlockSpec(arr.shape, lambda i, _n=arr.ndim: (0,) * _n))
        out_specs = pl.BlockSpec((tb, out_dim), lambda i: (i, 0))

        out = pl.pallas_call(
            kernel,
            out_shape=jax.ShapeDtypeStruct((b_pad, out_dim), jnp.float32),
            grid=(n_blocks,),
            in_specs=in_specs,
            out_specs=out_specs,
            compiler_params=pltpu.CompilerParams(
                dimension_semantics=("parallel",)),
        )(*xs, *flat)
        out = out[:B]

    return out.reshape(*head_shape, out_dim)


def init_critic_params(key, state_dim, action_dim=None, hidden_features=128,
                       hidden_layers=2):
    """PyTorch nn.Linear-style init U(-1/sqrt(fan_in), 1/sqrt(fan_in)); weights stored (in, out)."""
    in_dim = state_dim + (action_dim if action_dim else 0)
    if hidden_layers == 0:
        dims = [(in_dim, 1)]
    else:
        dims = [(in_dim, hidden_features)]
        dims += [(hidden_features, hidden_features)] * (hidden_layers - 1)
        dims += [(hidden_features, 1)]

    keys = jax.random.split(key, 2 * len(dims))
    weights = []
    for i, (fi, fo) in enumerate(dims):
        bound = 1.0 / (fi ** 0.5)
        w = jax.random.uniform(keys[2 * i], (fi, fo), jnp.float32, -bound, bound)
        b = jax.random.uniform(keys[2 * i + 1], (1, fo), jnp.float32, -bound, bound)
        weights.append((w, b))
    return {"weights": weights}


def reference_forward(params, state, action=None):
    """Pure-JAX reference mirroring the PyTorch Critic."""
    x = jnp.concatenate([state, action], axis=-1) if action is not None else state
    head_shape = x.shape[:-1]
    h = x.reshape(-1, x.shape[-1]).astype(jnp.float32)
    ws = params["weights"]
    for i, (w, b) in enumerate(ws):
        h = h @ w + b
        if i < len(ws) - 1:
            h = _leaky_relu(h)
    return h.reshape(*head_shape, ws[-1][0].shape[1])


if __name__ == "__main__":
    B, STATE_DIM, ACTION_DIM, HIDDEN, LAYERS = 8, 16, 4, 32, 2

    key = jax.random.PRNGKey(0)
    k_pq, k_pv, k_p0, k_s, k_a, k_s2 = jax.random.split(key, 6)

    # --- Q-style critic: value of (state, action) pair (fused concat path) ---
    q_params = init_critic_params(k_pq, STATE_DIM, ACTION_DIM, HIDDEN, LAYERS)
    state = jax.random.normal(k_s, (B, STATE_DIM), jnp.float32)
    action = jax.random.normal(k_a, (B, ACTION_DIM), jnp.float32)

    q = critic_forward(q_params, state, action)
    jax.block_until_ready(q)
    q_ref = reference_forward(q_params, state, action)
    assert q.shape == (B, 1)
    assert jnp.allclose(q, q_ref, atol=1e-5, rtol=1e-5)

    # --- V-style critic (no action), extra leading dims, batch-tiled grid path ---
    v_params = init_critic_params(k_pv, STATE_DIM, None, HIDDEN, LAYERS)
    state2 = jax.random.normal(k_s2, (3, 13, STATE_DIM), jnp.float32)   # 39 rows, ragged vs TB=8

    v = critic_forward(v_params, state2, block_b=8)    # exercises grid + padding path
    jax.block_until_ready(v)
    v_ref = reference_forward(v_params, state2)
    assert v.shape == (3, 13, 1)
    assert jnp.allclose(v, v_ref, atol=1e-5, rtol=1e-5)

    # small-batch no-grid path on the same data
    v_small = critic_forward(v_params, state2)
    jax.block_until_ready(v_small)
    assert jnp.allclose(v_small, v_ref, atol=1e-5, rtol=1e-5)

    # --- hidden_layers=0 critic (single Linear, identity output) ---
    lin_params = init_critic_params(k_p0, STATE_DIM, ACTION_DIM, HIDDEN, hidden_layers=0)
    y = critic_forward(lin_params, state, action)
    jax.block_until_ready(y)
    y_ref = reference_forward(lin_params, state, action)
    assert jnp.allclose(y, y_ref, atol=1e-5, rtol=1e-5)

    print("KERNEL_OK")
</pallas_src>

<mosaic_0001>
module attributes {stable_mosaic.version = 11 : i64} {
  func.func @critic_kernel(%arg0: memref<8x16xf32, #tpu.memory_space<vmem>>, %arg1: memref<8x4xf32, #tpu.memory_space<vmem>>, %arg2: memref<16x32xf32, #tpu.memory_space<vmem>>, %arg3: memref<4x32xf32, #tpu.memory_space<vmem>>, %arg4: memref<1x32xf32, #tpu.memory_space<vmem>>, %arg5: memref<32x32xf32, #tpu.memory_space<vmem>>, %arg6: memref<1x32xf32, #tpu.memory_space<vmem>>, %arg7: memref<32x1xf32, #tpu.memory_space<vmem>>, %arg8: memref<1x1xf32, #tpu.memory_space<vmem>>, %arg9: memref<8x1xf32, #tpu.memory_space<vmem>>) attributes {dimension_semantics = [], scalar_prefetch = 0 : i64, scratch_operands = 0 : i64, tpu.core_type = #tpu.core_type<tc>} {
    %c0 = arith.constant 0 : index
    %c0_0 = arith.constant 0 : index
    %0 = vector.load %arg0[%c0, %c0_0] : memref<8x16xf32, #tpu.memory_space<vmem>>, vector<8x16xf32>
    %c0_1 = arith.constant 0 : index
    %c0_2 = arith.constant 0 : index
    %1 = vector.load %arg1[%c0_1, %c0_2] : memref<8x4xf32, #tpu.memory_space<vmem>>, vector<8x4xf32>
    %c0_3 = arith.constant 0 : index
    %c0_4 = arith.constant 0 : index
    %2 = vector.load %arg2[%c0_3, %c0_4] : memref<16x32xf32, #tpu.memory_space<vmem>>, vector<16x32xf32>
    %cst = arith.constant dense<0.000000e+00> : vector<8x32xf32>
    %3 = tpu.matmul %0, %2, %cst {dimension_numbers = #tpu.dot_dimension_numbers<[1], [0], [0], [1], [0, 0, 1, 1], [], []>} : vector<8x16xf32>, vector<16x32xf32>, vector<8x32xf32> -> vector<8x32xf32>
    %c0_5 = arith.constant 0 : index
    %c0_6 = arith.constant 0 : index
    %4 = vector.load %arg3[%c0_5, %c0_6] : memref<4x32xf32, #tpu.memory_space<vmem>>, vector<4x32xf32>
    %cst_7 = arith.constant dense<0.000000e+00> : vector<8x32xf32>
    %5 = tpu.matmul %1, %4, %cst_7 {dimension_numbers = #tpu.dot_dimension_numbers<[1], [0], [0], [1], [0, 0, 1, 1], [], []>} : vector<8x4xf32>, vector<4x32xf32>, vector<8x32xf32> -> vector<8x32xf32>
    %6 = arith.addf %3, %5 : vector<8x32xf32>
    %c0_8 = arith.constant 0 : index
    %c0_9 = arith.constant 0 : index
    %7 = vector.load %arg4[%c0_8, %c0_9] : memref<1x32xf32, #tpu.memory_space<vmem>>, vector<1x32xf32>
    %8 = vector.broadcast %7 : vector<1x32xf32> to vector<8x32xf32>
    %9 = arith.addf %6, %8 : vector<8x32xf32>
    %cst_10 = arith.constant 0.000000e+00 : f32
    %10 = vector.broadcast %cst_10 : f32 to vector<8x32xf32>
    %11 = arith.cmpf oge, %9, %10 : vector<8x32xf32>
    %cst_11 = arith.constant 1.000000e-01 : f32
    %12 = vector.broadcast %cst_11 : f32 to vector<8x32xf32>
    %13 = arith.mulf %12, %9 : vector<8x32xf32>
    %14 = arith.select %11, %9, %13 : vector<8x32xi1>, vector<8x32xf32>
    %c0_12 = arith.constant 0 : index
    %c0_13 = arith.constant 0 : index
    %15 = vector.load %arg5[%c0_12, %c0_13] : memref<32x32xf32, #tpu.memory_space<vmem>>, vector<32x32xf32>
    %c0_14 = arith.constant 0 : index
    %c0_15 = arith.constant 0 : index
    %16 = vector.load %arg6[%c0_14, %c0_15] : memref<1x32xf32, #tpu.memory_space<vmem>>, vector<1x32xf32>
    %cst_16 = arith.constant dense<0.000000e+00> : vector<8x32xf32>
    %17 = tpu.matmul %14, %15, %cst_16 {dimension_numbers = #tpu.dot_dimension_numbers<[1], [0], [0], [1], [0, 0, 1, 1], [], []>} : vector<8x32xf32>, vector<32x32xf32>, vector<8x32xf32> -> vector<8x32xf32>
    %18 = vector.broadcast %16 : vector<1x32xf32> to vector<8x32xf32>
    %19 = arith.addf %17, %18 : vector<8x32xf32>
    %cst_17 = arith.constant 0.000000e+00 : f32
    %20 = vector.broadcast %cst_17 : f32 to vector<8x32xf32>
    %21 = arith.cmpf oge, %19, %20 : vector<8x32xf32>
    %cst_18 = arith.constant 1.000000e-01 : f32
    %22 = vector.broadcast %cst_18 : f32 to vector<8x32xf32>
    %23 = arith.mulf %22, %19 : vector<8x32xf32>
    %24 = arith.select %21, %19, %23 : vector<8x32xi1>, vector<8x32xf32>
    %c0_19 = arith.constant 0 : index
    %c0_20 = arith.constant 0 : index
    %25 = vector.load %arg7[%c0_19, %c0_20] : memref<32x1xf32, #tpu.memory_space<vmem>>, vector<32x1xf32>
    %c0_21 = arith.constant 0 : index
    %c0_22 = arith.constant 0 : index
    %26 = vector.load %arg8[%c0_21, %c0_22] : memref<1x1xf32, #tpu.memory_space<vmem>>, vector<1x1xf32>
    %cst_23 = arith.constant dense<0.000000e+00> : vector<8x1xf32>
    %27 = tpu.matmul %24, %25, %cst_23 {dimension_numbers = #tpu.dot_dimension_numbers<[1], [0], [0], [1], [0, 0, 1, 1], [], []>} : vector<8x32xf32>, vector<32x1xf32>, vector<8x1xf32> -> vector<8x1xf32>
    %28 = vector.broadcast %26 : vector<1x1xf32> to vector<8x1xf32>
    %29 = arith.addf %27, %28 : vector<8x1xf32>
    %c0_24 = arith.constant 0 : index
    %c0_25 = arith.constant 0 : index
    %30 = vector.load %arg9[%c0_24, %c0_25] : memref<8x1xf32, #tpu.memory_space<vmem>>, vector<8x1xf32>
    tpu.vector_store %arg9[%c0_24, %c0_25], %29 {strides = array<i32>} : memref<8x1xf32, #tpu.memory_space<vmem>>, vector<8x1xf32>,
    return
  }
}

</mosaic_0001>

<llo_original>
// kernel: tpu_custom_call.1
$region0: #{tpu_custom_call.1}
  #allocation0 [shape = 'u32[]', space=smem, size = 0x4, offset = 0x4, fixed_abs, tag = 'smem constant byte address 0x4 - core index']
  #allocation1 [shape = 'u32[72,128]{1,0:T(1,128)}', space=vmem, size = 0x9000, scoped, tag = 'internal scratch']
  #allocation2 [shape = 'f32[1,1]{1,0:T(1,128)S(1)}', space=vmem, size = 0x200, scoped, tag = 'scoped memory for tpu_custom_call.1']
  %s0 = inlined_call_operand.vmem [shape: f32[8,16], index: 0, kind: input, shape index: {}]
  %s1 = inlined_call_operand.vmem [shape: f32[8,4], index: 1, kind: input, shape index: {}]
  %s2 = inlined_call_operand.hbm [shape: f32[16,32], index: 2, kind: input, shape index: {}]
  %s3 = inlined_call_operand.vmem [shape: f32[4,32], index: 3, kind: input, shape index: {}]
  %s4 = inlined_call_operand.vmem [shape: f32[1,32], index: 4, kind: input, shape index: {}]
  %s5 = inlined_call_operand.vmem [shape: f32[32,32], index: 5, kind: input, shape index: {}]
  %s6 = inlined_call_operand.vmem [shape: f32[1,32], index: 6, kind: input, shape index: {}]
  %s7 = inlined_call_operand.vmem [shape: f32[32,1], index: 7, kind: input, shape index: {}]
  %s8 = inlined_call_operand.<no memory space> [shape: f32[1,1], index: 8, kind: input, shape index: {}]
  %s9 = inlined_call_operand.vmem [shape: f32[8,1], index: 9, kind: output, shape index: {}]
  %s10 = sld [smem:[#allocation0]]
  $region50: #{tpu_custom_call.1} parent=0
    _
  %s12 = ssub.s32 1, %s10
  %s13 = scalar_select 0, %s12, %s10
  %v14 = vstv %s8
  %15 = vst [vmem:[#allocation2] sm:$0x1] %v14
  $region1: #{tpu_custom_call.1} parent=0
    #allocation3 [shape = 'u8[8192]{0}', space=vmem, size = 0x2000, scoped, tag = 'input window, operand 2, single buffered']
    #allocation4 [shape = 's32[1]{0}', space=sflag, size = 0x4, scoped, tag = 'scoped memory for tpu_custom_call.1']
    %16 = vsyncpa [#allocation4], 0
    // Predicated region
    $region2: #{tpu_custom_call.1} parent=1 // pred_check
      _
    $region3: #{tpu_custom_call.1} parent=1 // pred_check_branch
      %18 = sbr.rel (0) target = $region5
    $region4: #{tpu_custom_call.1} parent=1 // pred_region
      _
    $region5: #{tpu_custom_call.1} parent=1 // pred_fallthru
      _
    // Predicated region
    $region6: #{tpu_custom_call.1} parent=1 // pred_check
      _
    $region7: #{tpu_custom_call.1} parent=1 // pred_check_branch
      %20 = sbr.rel (0) target = $region9
    $region8: #{tpu_custom_call.1} parent=1 // pred_region
      _
    $region9: #{tpu_custom_call.1} parent=1 // pred_fallthru
      _
    // Predicated region
    $region10: #{tpu_custom_call.1} parent=1 // pred_check
      _
    $region11: #{tpu_custom_call.1} parent=1 // pred_check_branch
      %22 = sbr.rel (0) target = $region13
    $region12: #{tpu_custom_call.1} parent=1 // pred_region
      %24 = vsyncadd [#allocation4], 0
      %s25 = sshll.u32 %s2, 4
      %s26 = int_to_ptr.hbm [resolvable:$true] %s25
      %s27 = sshll.u32 [#allocation3], 4
      %s28 = int_to_ptr.vmem [resolvable:$true] %s27
      %33 = dma.hbm_to_vmem [thread:$0]  %s26, 256, %s28, [#allocation4], 128, 128, 8
    $region13: #{tpu_custom_call.1} parent=1 // pred_fallthru
      _
    // Predicated region
    $region14: #{tpu_custom_call.1} parent=1 // pred_check
      _
    $region15: #{tpu_custom_call.1} parent=1 // pred_check_branch
      %35 = sbr.rel (0) target = $region17
    $region16: #{tpu_custom_call.1} parent=1 // pred_region
      _
    $region17: #{tpu_custom_call.1} parent=1 // pred_fallthru
      _
    // Predicated region
    $region18: #{tpu_custom_call.1} parent=1 // pred_check
      _
    $region19: #{tpu_custom_call.1} parent=1 // pred_check_branch
      %37 = sbr.rel (0) target = $region21
    $region20: #{tpu_custom_call.1} parent=1 // pred_region
      _
    $region21: #{tpu_custom_call.1} parent=1 // pred_fallthru
      _
    // Predicated region
    $region22: #{tpu_custom_call.1} parent=1 // pred_check
      _
    $region23: #{tpu_custom_call.1} parent=1 // pred_check_branch
      %39 = sbr.rel (0) target = $region25
    $region24: #{tpu_custom_call.1} parent=1 // pred_region
      _
    $region25: #{tpu_custom_call.1} parent=1 // pred_fallthru
      _
    // Predicated region
    $region26: #{tpu_custom_call.1} parent=1 // pred_check
      _
    $region27: #{tpu_custom_call.1} parent=1 // pred_check_branch
      %41 = sbr.rel (0) target = $region29
    $region28: #{tpu_custom_call.1} parent=1 // pred_region
      _
    $region29: #{tpu_custom_call.1} parent=1 // pred_fallthru
      _
    // Predicated region
    $region30: #{tpu_custom_call.1} parent=1 // pred_check
      _
    $region31: #{tpu_custom_call.1} parent=1 // pred_check_branch
      %43 = sbr.rel (0) target = $region33
    $region32: #{tpu_custom_call.1} parent=1 // pred_region
      _
    $region33: #{tpu_custom_call.1} parent=1 // pred_fallthru
      _
    // Predicated region
    $region34: #{tpu_custom_call.1} parent=1 // pred_check
      _
    $region35: #{tpu_custom_call.1} parent=1 // pred_check_branch
      %45 = sbr.rel (0) target = $region37
    $region36: #{tpu_custom_call.1} parent=1 // pred_region
      _
    $region37: #{tpu_custom_call.1} parent=1 // pred_fallthru
      _
    // Predicated region
    $region38: #{tpu_custom_call.1} parent=1 // pred_check
      _
    $region39: #{tpu_custom_call.1} parent=1 // pred_check_branch
      %47 = sbr.rel (0) target = $region41
    $region40: #{tpu_custom_call.1} parent=1 // pred_region
      %49 = dma.done [#allocation4], 256
    $region41: #{tpu_custom_call.1} parent=1 // pred_fallthru
      _
    %v50 = vld [vmem:[%s0] sm:$0xff]
    %v51 = vld [vmem:[%s1] sm:$0xff]
    %v52 = vld [vmem:[#allocation3] sm:$0xff]
    %v53 = vld [vmem:[#allocation3 + $0x8] sm:$0xff]
    %v54 = vld [vmem:[%s3] sm:$0xf]
    %vm55 = vcmask 31744
    %v57 = vsel %vm55, %v51, 0
    %vm59 = vcmask 1043456
    %v61 = vsel %vm59, %v54, 0
    %63 = vmatpush.msra.mxu0 0.0
    %64 = vmatpush.msra.mxu0 0.0
    %65 = vmatpush.msra.mxu0 0.0
    %66 = vmatpush.msra.mxu0 0.0
    %67 = vmatpush.msra.mxu0 0.0
    %68 = vmatpush.msra.mxu0 0.0
    %69 = vmatpush.msra.mxu0 0.0
    %70 = vmatpush.msra.mxu0 0.0
    %71 = vmatpush.msra.mxu0 0.0
    %72 = vmatpush.msra.mxu0 0.0
    %73 = vmatpush.msra.mxu0 0.0
    %74 = vmatpush.msra.mxu0 0.0
    %75 = vmatpush.msra.mxu0 0.0
    %76 = vmatpush.msra.mxu0 0.0
    %77 = vmatpush.msra.mxu0 0.0
    %78 = vmatpush.msra.mxu0 %v61
    %79 = vmatmul.f32.gmra.mxu0 %v57
    %v80 = vpop.f32.mrf.mxu0
    %v81 = vadd.f32 0.0, %v80
    %82 = vdwg.mxu0
    %vm83 = vcmask 130048
    %v85 = vsel %vm83, %v50, 0
    %87 = vmatpush.msra.mxu0 0.0
    %88 = vmatpush.msra.mxu0 0.0
    %89 = vmatpush.msra.mxu0 0.0
    %90 = vmatpush.msra.mxu0 0.0
    %91 = vmatpush.msra.mxu0 0.0
    %92 = vmatpush.msra.mxu0 0.0
    %93 = vmatpush.msra.mxu0 0.0
    %94 = vmatpush.msra.mxu0 0.0
    %95 = vmatpush.msra.mxu0 0.0
    %96 = vmatpush.msra.mxu0 0.0
    %97 = vmatpush.msra.mxu0 0.0
    %98 = vmatpush.msra.mxu0 0.0
    %99 = vmatpush.msra.mxu0 0.0
    %100 = vmatpush.msra.mxu0 0.0
    %101 = vmatpush.msra.mxu0 %v53
    %102 = vmatpush.msra.mxu0 %v52
    %103 = vmatmul.f32.gmra.mxu0 %v85
    %v104 = vpop.f32.mrf.mxu0
    %v105 = vadd.f32 %v81, %v104
    %106 = vdwg.mxu0
    %v107 = vld [vmem:[%s4] sm:$0x1]
    %v109 = vperm.slane %v107, 0
    %v111 = vadd.f32 %v105, %v109
    %vm112 = vcmp.ge.f32.partialorder %v111, 0.0
    %v113 = vmul.f32 %v111, 0.1
    %v114 = vsel %vm112, %v111, %v113
    %v115 = vld [vmem:[%s5] sm:$0xff]
    %v116 = vld [vmem:[%s5 + $0x8] sm:$0xff]
    %v117 = vld [vmem:[%s5 + $0x10] sm:$0xff]
    %v118 = vld [vmem:[%s5 + $0x18] sm:$0xff]
    %v119 = vld [vmem:[%s6] sm:$0x1]
    %v121 = vperm.slane %v119, 0
    %vm123 = vcmask 261120
    %v125 = vsel %vm123, %v114, 0
    %127 = vmatpush.msra.mxu0 0.0
    %128 = vmatpush.msra.mxu0 0.0
    %129 = vmatpush.msra.mxu0 0.0
    %130 = vmatpush.msra.mxu0 0.0
    %131 = vmatpush.msra.mxu0 0.0
    %132 = vmatpush.msra.mxu0 0.0
    %133 = vmatpush.msra.mxu0 0.0
    %134 = vmatpush.msra.mxu0 0.0
    %135 = vmatpush.msra.mxu0 0.0
    %136 = vmatpush.msra.mxu0 0.0
    %137 = vmatpush.msra.mxu0 0.0
    %138 = vmatpush.msra.mxu0 0.0
    %139 = vmatpush.msra.mxu0 %v118
    %140 = vmatpush.msra.mxu0 %v117
    %141 = vmatpush.msra.mxu0 %v116
    %142 = vmatpush.msra.mxu0 %v115
    %143 = vmatmul.f32.gmra.mxu0 %v125
    %v144 = vpop.f32.mrf.mxu0
    %v145 = vadd.f32 %v121, %v144
    %146 = vdwg.mxu0
    %vm147 = vcmp.ge.f32.partialorder %v145, 0.0
    %v148 = vmul.f32 %v145, 0.1
    %v149 = vsel %vm147, %v145, %v148
    %v150 = vld [vmem:[%s7] sm:$0xff]
    %v151 = vld [vmem:[%s7 + $0x8] sm:$0xff]
    %v152 = vld [vmem:[%s7 + $0x10] sm:$0xff]
    %v153 = vld [vmem:[%s7 + $0x18] sm:$0xff]
    %v154 = vld [vmem:[#allocation2] sm:$0x1]
    %v156 = vperm.slane %v154, 0
    %v159 = vsel %vm123, %v149, 0
    %161 = vmatpush.msra.mxu0 0.0
    %162 = vmatpush.msra.mxu0 0.0
    %163 = vmatpush.msra.mxu0 0.0
    %164 = vmatpush.msra.mxu0 0.0
    %165 = vmatpush.msra.mxu0 0.0
    %166 = vmatpush.msra.mxu0 0.0
    %167 = vmatpush.msra.mxu0 0.0
    %168 = vmatpush.msra.mxu0 0.0
    %169 = vmatpush.msra.mxu0 0.0
    %170 = vmatpush.msra.mxu0 0.0
    %171 = vmatpush.msra.mxu0 0.0
    %172 = vmatpush.msra.mxu0 0.0
    %173 = vmatpush.msra.mxu0 %v153
    %174 = vmatpush.msra.mxu0 %v152
    %175 = vmatpush.msra.mxu0 %v151
    %176 = vmatpush.msra.mxu0 %v150
    %177 = vmatmul.f32.gmra.mxu0 %v159
    %v178 = vpop.f32.mrf.mxu0
    %v179 = vadd.f32 %v156, %v178
    %180 = vdwg.mxu0
    %vm181 = vcmask 7168
    %182 = vst.msk [vmem:[%s9] sm:$0xff] %vm181, %v179
    // Predicated region
    $region42: #{tpu_custom_call.1} parent=1 // pred_check
      _
    $region43: #{tpu_custom_call.1} parent=1 // pred_check_branch
      %184 = sbr.rel (0) target = $region45
    $region44: #{tpu_custom_call.1} parent=1 // pred_region
      _
    $region45: #{tpu_custom_call.1} parent=1 // pred_fallthru
      _
    // Predicated region
    $region46: #{tpu_custom_call.1} parent=1 // pred_check
      _
    $region47: #{tpu_custom_call.1} parent=1 // pred_check_branch
      %186 = sbr.rel (0) target = $region49
    $region48: #{tpu_custom_call.1} parent=1 // pred_region
      _
    $region49: #{tpu_custom_call.1} parent=1 // pred_fallthru
      _
    %187 = vsyncpa [#allocation4], 1

</llo_original>
